<compile_context>
chip_gen: v7x
topology: tpu7x:2x2x1
jax: 0.10.0
libtpu: 0.0.40
codegen_flags: <defaults>
</compile_context>

<pallas_src>
import jax
import jax.numpy as jnp
from jax.experimental import pallas as pl
from jax.experimental.pallas import tpu as pltpu


def _mlp_kernel(x_ref, w1_ref, b1_ref, w2_ref, b2_ref, w3_ref, b3_ref, o_ref):
    """Full MLP forward for one batch tile, feature-major activations.

    x_ref : (in_dim, block_b)  fused [state; action] tile, batch on lanes (lane-dense)
    w1_ref: (128, in_dim)      b1_ref: (128, 1)
    w2_ref: (64, 128)          b2_ref: (64, 1)
    w3_ref: (64, 1)            b3_ref: (1, 1) scalar in SMEM
    o_ref : (1, block_b)       lane-dense output row
    """
    x = x_ref[...]

    # Layer 1: single K=20 MXU contraction (concat already fused in the input slab).
    h1 = jnp.dot(w1_ref[...], x, preferred_element_type=jnp.float32)   # (128, block_b)
    h1 = jnp.maximum(h1 + b1_ref[...], 0.0)

    # Layer 2: (64,128) @ (128, block_b) on the MXU with f32 accumulation.
    h2 = jnp.dot(w2_ref[...], h1, preferred_element_type=jnp.float32)  # (64, block_b)
    h2 = jnp.maximum(h2 + b2_ref[...], 0.0)

    # Layer 3 (64 -> 1): VPU multiply + cross-sublane (XLU) reduce instead of an N=1
    # matmul; the result is already a lane-dense (1, block_b) row.
    out = jnp.sum(h2 * w3_ref[...], axis=0, keepdims=True) + b3_ref[0, 0]
    o_ref[...] = out.astype(o_ref.dtype)


def _pick_block_b(batch, max_block_b):
    """Choose the batch-tile width (lane dim of the feature-major tiles).

    - batch <= 128: one exact tile (block dims == full dims, any size legal).
    - 128 < batch <= 256: two 128-wide tiles (both v7x TensorCores get a step).
    - batch > 256: target >= 4 tiles (>= 2 grid steps per v7x core), block_b a
      multiple of 128, capped at max_block_b (default 8192 rows ~= 0.7 MiB of real
      input bytes per step, amortizing the ~0.35 us per-grid-step overhead).
    """
    if batch <= 128:
        return batch
    max_block_b = max(128, (max_block_b // 128) * 128)
    target_tiles = 2 if batch <= 256 else 4
    per_tile = -(-batch // target_tiles)          # cdiv(batch, target_tiles)
    per_tile = -(-per_tile // 128) * 128          # round up to a multiple of 128
    return min(max_block_b, per_tile)


def reward_network_forward(state, action, params, *, max_block_b=8192):
    """Pallas forward pass of RewardNetwork.

    state : (B, state_dim) f32
    action: (B,) or (B, action_dim) f32
    params: PyTorch layout (W1 (128, sd+ad), b1 (128,), W2 (64, 128), b2 (64,),
                            W3 (1, 64), b3 (1,))
    returns (B, 1) f32
    """
    if action.ndim == 1:
        action = action[:, None]

    w1, b1, w2, b2, w3, b3 = params
    B, sd = state.shape
    _, ad = action.shape
    in_dim = sd + ad
    h1_dim = w1.shape[0]    # 128
    h2_dim = w2.shape[0]    # 64

    # One-time repack outside the kernel (review item 1+2): concat + transpose into a
    # feature-major, lane-dense (in_dim, B) slab.  No per-step transpose, no lane-padded
    # activation tiles, and layer 1 becomes a single K=in_dim contraction.
    x_t = jnp.concatenate([state, action], axis=-1).T          # (in_dim, B)

    # Tiny static weight reshapes (columns for lane-broadcast bias adds).
    b1c = b1.reshape(h1_dim, 1)
    b2c = b2.reshape(h2_dim, 1)
    w3c = w3.reshape(h2_dim, 1)
    b3s = b3.reshape(1, 1)

    block_b = _pick_block_b(B, max_block_b)
    num_tiles = pl.cdiv(B, block_b)
    b_pad = num_tiles * block_b            # output slab width (sliced back to B below)

    flops = 2 * B * (in_dim * h1_dim + h1_dim * h2_dim + h2_dim)
    bytes_accessed = 4 * (B * (in_dim + 1)
                          + h1_dim * (in_dim + 1)
                          + h2_dim * (h1_dim + 1)
                          + h2_dim + 1)

    out_slab = pl.pallas_call(
        _mlp_kernel,
        out_shape=jax.ShapeDtypeStruct((1, b_pad), jnp.float32),
        grid_spec=pltpu.PrefetchScalarGridSpec(
            num_scalar_prefetch=0,
            grid=(num_tiles,),
            in_specs=[
                pl.BlockSpec((in_dim, block_b), lambda i: (0, i)),   # fused input tile
                pl.BlockSpec((h1_dim, in_dim), lambda i: (0, 0)),    # W1 (resident)
                pl.BlockSpec((h1_dim, 1), lambda i: (0, 0)),         # b1
                pl.BlockSpec((h2_dim, h1_dim), lambda i: (0, 0)),    # W2
                pl.BlockSpec((h2_dim, 1), lambda i: (0, 0)),         # b2
                pl.BlockSpec((h2_dim, 1), lambda i: (0, 0)),         # W3 (as column)
                pl.BlockSpec(memory_space=pltpu.MemorySpace.SMEM),   # b3 scalar
            ],
            out_specs=pl.BlockSpec((1, block_b), lambda i: (0, i)),  # lane-dense row
        ),
        compiler_params=pltpu.CompilerParams(
            dimension_semantics=("parallel",),
        ),
        cost_estimate=pl.CostEstimate(
            flops=flops, transcendentals=0, bytes_accessed=bytes_accessed),
    )(x_t, w1, b1c, w2, b2c, w3c, b3s)

    # Columns >= B come from the padded partial last input block (all per-column math is
    # independent, so garbage never leaks into real columns); slice them off and restore
    # the PyTorch (B, 1) shape.
    return out_slab[0, :B].reshape(B, 1)


def init_params(key, state_dim, action_dim):
    """Deterministic synthetic init, PyTorch layout + PyTorch-like uniform(+-1/sqrt(fan_in))."""
    in_dim = state_dim + action_dim
    dims = [(in_dim, 128), (128, 64), (64, 1)]
    params = []
    for fan_in, fan_out in dims:
        key, kw, kb = jax.random.split(key, 3)
        bound = float(fan_in) ** -0.5
        w = jax.random.uniform(kw, (fan_out, fan_in), jnp.float32, -bound, bound)
        b = jax.random.uniform(kb, (fan_out,), jnp.float32, -bound, bound)
        params += [w, b]
    return tuple(params)


def reference_forward(state, action, params):
    """Pure-JAX reference (identical math to the PyTorch module)."""
    if action.ndim == 1:
        action = action[:, None]
    x = jnp.concatenate([state, action], axis=-1)
    w1, b1, w2, b2, w3, b3 = params
    h1 = jnp.maximum(x @ w1.T + b1, 0.0)
    h2 = jnp.maximum(h1 @ w2.T + b2, 0.0)
    return h2 @ w3.T + b3


if __name__ == "__main__":
    key = jax.random.PRNGKey(0)
    state_dim, action_dim, batch = 16, 4, 8

    kp, ks, ka = jax.random.split(key, 3)
    params = init_params(kp, state_dim, action_dim)
    state = jax.random.normal(ks, (batch, state_dim), jnp.float32)
    action = jax.random.normal(ka, (batch, action_dim), jnp.float32)

    out = reward_network_forward(state, action, params)
    jax.block_until_ready(out)

    ref = reference_forward(state, action, params)
    assert out.shape == (batch, 1), out.shape
    assert jnp.allclose(out, ref, atol=1e-5, rtol=1e-5), "mismatch vs reference"

    # Also exercise the multi-tile path (grid > 1, padded partial last input block).
    b_big = 300
    ks2, ka2 = jax.random.split(jax.random.PRNGKey(1))
    state2 = jax.random.normal(ks2, (b_big, state_dim), jnp.float32)
    action2 = jax.random.normal(ka2, (b_big, action_dim), jnp.float32)
    out2 = reward_network_forward(state2, action2, params, max_block_b=128)
    jax.block_until_ready(out2)
    ref2 = reference_forward(state2, action2, params)
    assert out2.shape == (b_big, 1), out2.shape
    assert jnp.allclose(out2, ref2, atol=1e-5, rtol=1e-5), "mismatch vs reference (tiled)"

    print("KERNEL_OK")
</pallas_src>

<mosaic_0001>
module attributes {stable_mosaic.version = 11 : i64} {
  func.func @_mlp_kernel(%arg0: i32, %arg1: memref<20x8xf32, #tpu.memory_space<vmem>>, %arg2: memref<128x20xf32, #tpu.memory_space<vmem>>, %arg3: memref<128x1xf32, #tpu.memory_space<vmem>>, %arg4: memref<64x128xf32, #tpu.memory_space<vmem>>, %arg5: memref<64x1xf32, #tpu.memory_space<vmem>>, %arg6: memref<64x1xf32, #tpu.memory_space<vmem>>, %arg7: memref<1x1xf32, #tpu.memory_space<smem>>, %arg8: memref<1x8xf32, #tpu.memory_space<vmem>>) attributes {dimension_semantics = [#tpu.dimension_semantics<parallel>], iteration_bounds = array<i64: 1>, scalar_prefetch = 0 : i64, scratch_operands = 0 : i64, tpu.core_type = #tpu.core_type<tc>, window_params = [{transform_indices = @transform_0, window_bounds = array<i64: 20, 8>}, {pipeline_mode = #tpu.pipeline_mode<synchronous>, transform_indices = @transform_1, window_bounds = array<i64: 128, 20>}, {pipeline_mode = #tpu.pipeline_mode<synchronous>, transform_indices = @transform_2, window_bounds = array<i64: 128, 1>}, {pipeline_mode = #tpu.pipeline_mode<synchronous>, transform_indices = @transform_3, window_bounds = array<i64: 64, 128>}, {pipeline_mode = #tpu.pipeline_mode<synchronous>, transform_indices = @transform_4, window_bounds = array<i64: 64, 1>}, {pipeline_mode = #tpu.pipeline_mode<synchronous>, transform_indices = @transform_5, window_bounds = array<i64: 64, 1>}, {transform_indices = @transform_6, window_bounds = array<i64: 1, 1>}, {transform_indices = @transform_7, window_bounds = array<i64: 1, 8>}]} {
    %c0 = arith.constant 0 : index
    %c0_0 = arith.constant 0 : index
    %0 = vector.load %arg1[%c0, %c0_0] : memref<20x8xf32, #tpu.memory_space<vmem>>, vector<20x8xf32>
    %c0_1 = arith.constant 0 : index
    %c0_2 = arith.constant 0 : index
    %1 = vector.load %arg2[%c0_1, %c0_2] : memref<128x20xf32, #tpu.memory_space<vmem>>, vector<128x20xf32>
    %cst = arith.constant dense<0.000000e+00> : vector<128x8xf32>
    %2 = tpu.matmul %1, %0, %cst {dimension_numbers = #tpu.dot_dimension_numbers<[1], [0], [0], [1], [0, 0, 1, 1], [], []>} : vector<128x20xf32>, vector<20x8xf32>, vector<128x8xf32> -> vector<128x8xf32>
    %c0_3 = arith.constant 0 : index
    %c0_4 = arith.constant 0 : index
    %3 = vector.load %arg3[%c0_3, %c0_4] : memref<128x1xf32, #tpu.memory_space<vmem>>, vector<128x1xf32>
    %4 = vector.broadcast %3 : vector<128x1xf32> to vector<128x8xf32>
    %5 = arith.addf %2, %4 : vector<128x8xf32>
    %cst_5 = arith.constant 0.000000e+00 : f32
    %6 = vector.broadcast %cst_5 : f32 to vector<128x8xf32>
    %7 = arith.maximumf %5, %6 : vector<128x8xf32>
    %c0_6 = arith.constant 0 : index
    %c0_7 = arith.constant 0 : index
    %8 = vector.load %arg4[%c0_6, %c0_7] : memref<64x128xf32, #tpu.memory_space<vmem>>, vector<64x128xf32>
    %cst_8 = arith.constant dense<0.000000e+00> : vector<64x8xf32>
    %9 = tpu.matmul %8, %7, %cst_8 {dimension_numbers = #tpu.dot_dimension_numbers<[1], [0], [0], [1], [0, 0, 1, 1], [], []>} : vector<64x128xf32>, vector<128x8xf32>, vector<64x8xf32> -> vector<64x8xf32>
    %c0_9 = arith.constant 0 : index
    %c0_10 = arith.constant 0 : index
    %10 = vector.load %arg5[%c0_9, %c0_10] : memref<64x1xf32, #tpu.memory_space<vmem>>, vector<64x1xf32>
    %11 = vector.broadcast %10 : vector<64x1xf32> to vector<64x8xf32>
    %12 = arith.addf %9, %11 : vector<64x8xf32>
    %cst_11 = arith.constant 0.000000e+00 : f32
    %13 = vector.broadcast %cst_11 : f32 to vector<64x8xf32>
    %14 = arith.maximumf %12, %13 : vector<64x8xf32>
    %c0_12 = arith.constant 0 : index
    %c0_13 = arith.constant 0 : index
    %15 = vector.load %arg6[%c0_12, %c0_13] : memref<64x1xf32, #tpu.memory_space<vmem>>, vector<64x1xf32>
    %16 = vector.broadcast %15 : vector<64x1xf32> to vector<64x8xf32>
    %17 = arith.mulf %14, %16 : vector<64x8xf32>
    %cst_14 = arith.constant dense<0.000000e+00> : vector<8xf32>
    %18 = vector.multi_reduction <add>, %17, %cst_14 [0] : vector<64x8xf32> to vector<8xf32>
    %19 = vector.shape_cast %18 : vector<8xf32> to vector<1x8xf32>
    %c0_15 = arith.constant 0 : index
    %c0_16 = arith.constant 0 : index
    %20 = memref.load %arg7[%c0_15, %c0_16] : memref<1x1xf32, #tpu.memory_space<smem>>
    %21 = vector.broadcast %20 : f32 to vector<1x8xf32>
    %22 = arith.addf %19, %21 : vector<1x8xf32>
    %c0_17 = arith.constant 0 : index
    %c0_18 = arith.constant 0 : index
    %23 = vector.load %arg8[%c0_17, %c0_18] : memref<1x8xf32, #tpu.memory_space<vmem>>, vector<1x8xf32>
    tpu.vector_store %arg8[%c0_17, %c0_18], %22 {strides = array<i32>} : memref<1x8xf32, #tpu.memory_space<vmem>>, vector<1x8xf32>,
    return
  }
  func.func @transform_0(%arg0: i32) -> (i32, i32) {
    %c0_i32 = arith.constant 0 : i32
    %c0_i32_0 = arith.constant 0 : i32
    return %c0_i32, %arg0 : i32, i32
  }
  func.func @transform_1(%arg0: i32) -> (i32, i32) {
    %c0_i32 = arith.constant 0 : i32
    %c0_i32_0 = arith.constant 0 : i32
    %c0_i32_1 = arith.constant 0 : i32
    return %c0_i32, %c0_i32_0 : i32, i32
  }
  func.func @transform_2(%arg0: i32) -> (i32, i32) {
    %c0_i32 = arith.constant 0 : i32
    %c0_i32_0 = arith.constant 0 : i32
    %c0_i32_1 = arith.constant 0 : i32
    return %c0_i32, %c0_i32_0 : i32, i32
  }
  func.func @transform_3(%arg0: i32) -> (i32, i32) {
    %c0_i32 = arith.constant 0 : i32
    %c0_i32_0 = arith.constant 0 : i32
    %c0_i32_1 = arith.constant 0 : i32
    return %c0_i32, %c0_i32_0 : i32, i32
  }
  func.func @transform_4(%arg0: i32) -> (i32, i32) {
    %c0_i32 = arith.constant 0 : i32
    %c0_i32_0 = arith.constant 0 : i32
    %c0_i32_1 = arith.constant 0 : i32
    return %c0_i32, %c0_i32_0 : i32, i32
  }
  func.func @transform_5(%arg0: i32) -> (i32, i32) {
    %c0_i32 = arith.constant 0 : i32
    %c0_i32_0 = arith.constant 0 : i32
    %c0_i32_1 = arith.constant 0 : i32
    return %c0_i32, %c0_i32_0 : i32, i32
  }
  func.func @transform_6(%arg0: i32) -> (i32, i32) {
    %c0_i32 = arith.constant 0 : i32
    %c0_i32_0 = arith.constant 0 : i32
    %c0_i32_1 = arith.constant 0 : i32
    return %c0_i32, %c0_i32_0 : i32, i32
  }
  func.func @transform_7(%arg0: i32) -> (i32, i32) {
    %c0_i32 = arith.constant 0 : i32
    %c0_i32_0 = arith.constant 0 : i32
    return %c0_i32, %arg0 : i32, i32
  }
}

</mosaic_0001>

<llo_original>
// kernel: tpu_custom_call.1
$region0: #{tpu_custom_call.1}
  #allocation0 [shape = 'u32[]', space=smem, size = 0x4, offset = 0x4, fixed_abs, tag = 'smem constant byte address 0x4 - core index']
  #allocation1 [shape = 'u32[144,128]{1,0:T(1,128)}', space=vmem, size = 0x12000, scoped, tag = 'internal scratch']
  #allocation2 [shape = 'f32[1,1]{1,0:T(1,128)S(6)}', space=smem, size = 0x200, scoped, tag = 'scoped memory for tpu_custom_call.1']
  %s0 = inlined_call_operand.vmem [shape: f32[20,8], index: 0, kind: input, shape index: {}]
  %s1 = inlined_call_operand.vmem [shape: f32[128,20], index: 1, kind: input, shape index: {}]
  %s2 = inlined_call_operand.vmem [shape: f32[128,1], index: 2, kind: input, shape index: {}]
  %s3 = inlined_call_operand.vmem [shape: f32[64,128], index: 3, kind: input, shape index: {}]
  %s4 = inlined_call_operand.vmem [shape: f32[64,1], index: 4, kind: input, shape index: {}]
  %s5 = inlined_call_operand.vmem [shape: f32[64,1], index: 5, kind: input, shape index: {}]
  %s6 = inlined_call_operand.<no memory space> [shape: f32[1,1], index: 6, kind: input, shape index: {}]
  %s7 = inlined_call_operand.hbm [shape: f32[1,8], index: 7, kind: output, shape index: {}]
  %s8 = sld [smem:[#allocation0]]
  $region38: #{tpu_custom_call.1} parent=0
    _
  %s10 = ssub.s32 1, %s8
  %s11 = scalar_select 0, %s10, %s8
  %12 = sst [smem:[#allocation2]] %s6
  $region1: #{tpu_custom_call.1} parent=0
    #allocation3 [shape = 'u8[512]{0}', space=vmem, size = 0x400, scoped, tag = 'output window, operand 0, single buffered']
    #allocation4 [shape = 's32[1]{0}', space=sflag, size = 0x4, scoped, tag = 'scoped memory for tpu_custom_call.1']
    %13 = vsyncpa [#allocation4], 0
    // Predicated region
    $region2: #{tpu_custom_call.1} parent=1 // pred_check
      _
    $region3: #{tpu_custom_call.1} parent=1 // pred_check_branch
      %15 = sbr.rel (0) target = $region5
    $region4: #{tpu_custom_call.1} parent=1 // pred_region
      _
    $region5: #{tpu_custom_call.1} parent=1 // pred_fallthru
      _
    // Predicated region
    $region6: #{tpu_custom_call.1} parent=1 // pred_check
      _
    $region7: #{tpu_custom_call.1} parent=1 // pred_check_branch
      %17 = sbr.rel (0) target = $region9
    $region8: #{tpu_custom_call.1} parent=1 // pred_region
      _
    $region9: #{tpu_custom_call.1} parent=1 // pred_fallthru
      _
    // Predicated region
    $region10: #{tpu_custom_call.1} parent=1 // pred_check
      _
    $region11: #{tpu_custom_call.1} parent=1 // pred_check_branch
      %19 = sbr.rel (0) target = $region13
    $region12: #{tpu_custom_call.1} parent=1 // pred_region
      _
    $region13: #{tpu_custom_call.1} parent=1 // pred_fallthru
      _
    // Predicated region
    $region14: #{tpu_custom_call.1} parent=1 // pred_check
      _
    $region15: #{tpu_custom_call.1} parent=1 // pred_check_branch
      %21 = sbr.rel (0) target = $region17
    $region16: #{tpu_custom_call.1} parent=1 // pred_region
      _
    $region17: #{tpu_custom_call.1} parent=1 // pred_fallthru
      _
    // Predicated region
    $region18: #{tpu_custom_call.1} parent=1 // pred_check
      _
    $region19: #{tpu_custom_call.1} parent=1 // pred_check_branch
      %23 = sbr.rel (0) target = $region21
    $region20: #{tpu_custom_call.1} parent=1 // pred_region
      _
    $region21: #{tpu_custom_call.1} parent=1 // pred_fallthru
      _
    // Predicated region
    $region22: #{tpu_custom_call.1} parent=1 // pred_check
      _
    $region23: #{tpu_custom_call.1} parent=1 // pred_check_branch
      %25 = sbr.rel (0) target = $region25
    $region24: #{tpu_custom_call.1} parent=1 // pred_region
      _
    $region25: #{tpu_custom_call.1} parent=1 // pred_fallthru
      _
    // Predicated region
    $region26: #{tpu_custom_call.1} parent=1 // pred_check
      _
    $region27: #{tpu_custom_call.1} parent=1 // pred_check_branch
      %27 = sbr.rel (0) target = $region29
    $region28: #{tpu_custom_call.1} parent=1 // pred_region
      _
    $region29: #{tpu_custom_call.1} parent=1 // pred_fallthru
      _
    %v28 = vld [vmem:[%s0] sm:$0xff]
    %v29 = vld [vmem:[%s0 + $0x8] sm:$0xff]
    %v30 = vld [vmem:[%s0 + $0x10] sm:$0xf]
    %v31 = vld [vmem:[%s1] sm:$0xff]
    %v32 = vld [vmem:[%s1 + $0x8] sm:$0xff]
    %v33 = vld [vmem:[%s1 + $0x10] sm:$0xff]
    %v34 = vld [vmem:[%s1 + $0x18] sm:$0xff]
    %v35 = vld [vmem:[%s1 + $0x20] sm:$0xff]
    %v36 = vld [vmem:[%s1 + $0x28] sm:$0xff]
    %v37 = vld [vmem:[%s1 + $0x30] sm:$0xff]
    %v38 = vld [vmem:[%s1 + $0x38] sm:$0xff]
    %v39 = vld [vmem:[%s1 + $0x40] sm:$0xff]
    %v40 = vld [vmem:[%s1 + $0x48] sm:$0xff]
    %v41 = vld [vmem:[%s1 + $0x50] sm:$0xff]
    %v42 = vld [vmem:[%s1 + $0x58] sm:$0xff]
    %v43 = vld [vmem:[%s1 + $0x60] sm:$0xff]
    %v44 = vld [vmem:[%s1 + $0x68] sm:$0xff]
    %v45 = vld [vmem:[%s1 + $0x70] sm:$0xff]
    %v46 = vld [vmem:[%s1 + $0x78] sm:$0xff]
    %v47 = vld [vmem:[%s2] sm:$0xff]
    %v48 = vld [vmem:[%s2 + $0x8] sm:$0xff]
    %v49 = vld [vmem:[%s2 + $0x10] sm:$0xff]
    %v50 = vld [vmem:[%s2 + $0x18] sm:$0xff]
    %v51 = vld [vmem:[%s2 + $0x20] sm:$0xff]
    %v52 = vld [vmem:[%s2 + $0x28] sm:$0xff]
    %v53 = vld [vmem:[%s2 + $0x30] sm:$0xff]
    %v54 = vld [vmem:[%s2 + $0x38] sm:$0xff]
    %v55 = vld [vmem:[%s2 + $0x40] sm:$0xff]
    %v56 = vld [vmem:[%s2 + $0x48] sm:$0xff]
    %v57 = vld [vmem:[%s2 + $0x50] sm:$0xff]
    %v58 = vld [vmem:[%s2 + $0x58] sm:$0xff]
    %v59 = vld [vmem:[%s2 + $0x60] sm:$0xff]
    %v60 = vld [vmem:[%s2 + $0x68] sm:$0xff]
    %v61 = vld [vmem:[%s2 + $0x70] sm:$0xff]
    %v62 = vld [vmem:[%s2 + $0x78] sm:$0xff]
    %64 = vset.pattern.permute.xlu0 0
    %65 = vperm.xlu0 %64, %v47
    %v66 = vpop.permute.xlu0 %65
    %69 = vset.pattern.permute.xlu0 0
    %70 = vperm.xlu0 %69, %v48
    %v71 = vpop.permute.xlu0 %70
    %74 = vset.pattern.permute.xlu0 0
    %75 = vperm.xlu0 %74, %v49
    %v76 = vpop.permute.xlu0 %75
    %79 = vset.pattern.permute.xlu0 0
    %80 = vperm.xlu0 %79, %v50
    %v81 = vpop.permute.xlu0 %80
    %84 = vset.pattern.permute.xlu0 0
    %85 = vperm.xlu0 %84, %v51
    %v86 = vpop.permute.xlu0 %85
    %89 = vset.pattern.permute.xlu0 0
    %90 = vperm.xlu0 %89, %v52
    %v91 = vpop.permute.xlu0 %90
    %94 = vset.pattern.permute.xlu0 0
    %95 = vperm.xlu0 %94, %v53
    %v96 = vpop.permute.xlu0 %95
    %99 = vset.pattern.permute.xlu0 0
    %100 = vperm.xlu0 %99, %v54
    %v101 = vpop.permute.xlu0 %100
    %104 = vset.pattern.permute.xlu0 0
    %105 = vperm.xlu0 %104, %v55
    %v106 = vpop.permute.xlu0 %105
    %109 = vset.pattern.permute.xlu0 0
    %110 = vperm.xlu0 %109, %v56
    %v111 = vpop.permute.xlu0 %110
    %114 = vset.pattern.permute.xlu0 0
    %115 = vperm.xlu0 %114, %v57
    %v116 = vpop.permute.xlu0 %115
    %119 = vset.pattern.permute.xlu0 0
    %120 = vperm.xlu0 %119, %v58
    %v121 = vpop.permute.xlu0 %120
    %124 = vset.pattern.permute.xlu0 0
    %125 = vperm.xlu0 %124, %v59
    %v126 = vpop.permute.xlu0 %125
    %129 = vset.pattern.permute.xlu0 0
    %130 = vperm.xlu0 %129, %v60
    %v131 = vpop.permute.xlu0 %130
    %134 = vset.pattern.permute.xlu0 0
    %135 = vperm.xlu0 %134, %v61
    %v136 = vpop.permute.xlu0 %135
    %139 = vset.pattern.permute.xlu0 0
    %140 = vperm.xlu0 %139, %v62
    %v141 = vpop.permute.xlu0 %140
    %vm143 = vcmask 162816
    %v145 = vsel %vm143, %v31, 0
    %v148 = vsel %vm143, %v32, 0
    %v151 = vsel %vm143, %v33, 0
    %v154 = vsel %vm143, %v34, 0
    %v157 = vsel %vm143, %v35, 0
    %v160 = vsel %vm143, %v36, 0
    %v163 = vsel %vm143, %v37, 0
    %v166 = vsel %vm143, %v38, 0
    %v169 = vsel %vm143, %v39, 0
    %v172 = vsel %vm143, %v40, 0
    %v175 = vsel %vm143, %v41, 0
    %v178 = vsel %vm143, %v42, 0
    %v181 = vsel %vm143, %v43, 0
    %v184 = vsel %vm143, %v44, 0
    %v187 = vsel %vm143, %v45, 0
    %v190 = vsel %vm143, %v46, 0
    %vm192 = vcmask 1043456
    %v194 = vsel %vm192, %v30, 0
    %196 = vmatprep.subr.mxu0 0.0
    %197 = vmatpush1.msra.mxu0 %v28
    %198 = vmatprep.subr.mxu0 0.0
    %199 = vmatpush1.msra.mxu0 %v29
    %200 = vmatprep.subr.mxu0 0.0
    %201 = vmatpush1.msra.mxu0 %v194
    %202 = vmatprep.subr.mxu0 0.0
    %203 = vmatpush1.msra.mxu0 0.0
    %204 = vmatprep.subr.mxu0 0.0
    %205 = vmatpush1.msra.mxu0 0.0
    %206 = vmatprep.subr.mxu0 0.0
    %207 = vmatpush1.msra.mxu0 0.0
    %208 = vmatprep.subr.mxu0 0.0
    %209 = vmatpush1.msra.mxu0 0.0
    %210 = vmatprep.subr.mxu0 0.0
    %211 = vmatpush1.msra.mxu0 0.0
    %212 = vmatprep.subr.mxu0 0.0
    %213 = vmatpush1.msra.mxu0 0.0
    %214 = vmatprep.subr.mxu0 0.0
    %215 = vmatpush1.msra.mxu0 0.0
    %216 = vmatprep.subr.mxu0 0.0
    %217 = vmatpush1.msra.mxu0 0.0
    %218 = vmatprep.subr.mxu0 0.0
    %219 = vmatpush1.msra.mxu0 0.0
    %220 = vmatprep.subr.mxu0 0.0
    %221 = vmatpush1.msra.mxu0 0.0
    %222 = vmatprep.subr.mxu0 0.0
    %223 = vmatpush1.msra.mxu0 0.0
    %224 = vmatprep.subr.mxu0 0.0
    %225 = vmatpush1.msra.mxu0 0.0
    %226 = vmatprep.subr.mxu0 0.0
    %227 = vmatpush1.msra.mxu0 0.0
    %228 = vmatprep.subr.mxu0 0.0
    %229 = vmatpush1.msra.mxu0 0.0
    %230 = vmatprep.subr.mxu0 0.0
    %231 = vmatpush1.msra.mxu0 0.0
    %232 = vmatprep.subr.mxu0 0.0
    %233 = vmatpush1.msra.mxu0 0.0
    %234 = vmatprep.subr.mxu0 0.0
    %235 = vmatpush1.msra.mxu0 0.0
    %236 = vmatprep.subr.mxu0 0.0
    %237 = vmatpush1.msra.mxu0 0.0
    %238 = vmatprep.subr.mxu0 0.0
    %239 = vmatpush1.msra.mxu0 0.0
    %240 = vmatprep.subr.mxu0 0.0
    %241 = vmatpush1.msra.mxu0 0.0
    %242 = vmatprep.subr.mxu0 0.0
    %243 = vmatpush1.msra.mxu0 0.0
    %244 = vmatprep.subr.mxu0 0.0
    %245 = vmatpush1.msra.mxu0 0.0
    %246 = vmatprep.subr.mxu0 0.0
    %247 = vmatpush1.msra.mxu0 0.0
    %248 = vmatprep.subr.mxu0 0.0
    %249 = vmatpush1.msra.mxu0 0.0
    %250 = vmatprep.subr.mxu0 0.0
    %251 = vmatpush1.msra.mxu0 0.0
    %252 = vmatprep.subr.mxu0 0.0
    %253 = vmatpush1.msra.mxu0 0.0
    %254 = vmatprep.subr.mxu0 0.0
    %255 = vmatpush1.msra.mxu0 0.0
    %256 = vmatprep.subr.mxu0 0.0
    %257 = vmatpush1.msra.mxu0 0.0
    %258 = vmatprep.subr.mxu0 0.0
    %259 = vmatpush1.msra.mxu0 0.0
    %260 = vmatprep.mubr.f32.mxu0 0.0
    %261 = vmatmul.mubr.f32.gmra.mrb[0].mxu0 %v145
    %v262 = vpop.f32.mrb[0].mxu0
    %v263 = vadd.f32 %v66, %v262
    %v264 = vpop.f32.mrb[0].mxu0
    %265 = vmatprep.mubr.f32.mxu0 0.0
    %266 = vmatmul.mubr.f32.gmra.mrb[0].mxu0 %v148
    %v267 = vpop.f32.mrb[0].mxu0
    %v268 = vadd.f32 %v71, %v267
    %v269 = vpop.f32.mrb[0].mxu0
    %270 = vmatprep.mubr.f32.mxu0 0.0
    %271 = vmatmul.mubr.f32.gmra.mrb[0].mxu0 %v151
    %v272 = vpop.f32.mrb[0].mxu0
    %v273 = vadd.f32 %v76, %v272
    %v274 = vpop.f32.mrb[0].mxu0
    %275 = vmatprep.mubr.f32.mxu0 0.0
    %276 = vmatmul.mubr.f32.gmra.mrb[0].mxu0 %v154
    %v277 = vpop.f32.mrb[0].mxu0
    %v278 = vadd.f32 %v81, %v277
    %v279 = vpop.f32.mrb[0].mxu0
    %280 = vmatprep.mubr.f32.mxu0 0.0
    %281 = vmatmul.mubr.f32.gmra.mrb[0].mxu0 %v157
    %v282 = vpop.f32.mrb[0].mxu0
    %v283 = vadd.f32 %v86, %v282
    %v284 = vpop.f32.mrb[0].mxu0
    %285 = vmatprep.mubr.f32.mxu0 0.0
    %286 = vmatmul.mubr.f32.gmra.mrb[0].mxu0 %v160
    %v287 = vpop.f32.mrb[0].mxu0
    %v288 = vadd.f32 %v91, %v287
    %v289 = vpop.f32.mrb[0].mxu0
    %290 = vmatprep.mubr.f32.mxu0 0.0
    %291 = vmatmul.mubr.f32.gmra.mrb[0].mxu0 %v163
    %v292 = vpop.f32.mrb[0].mxu0
    %v293 = vadd.f32 %v96, %v292
    %v294 = vpop.f32.mrb[0].mxu0
    %295 = vmatprep.mubr.f32.mxu0 0.0
    %296 = vmatmul.mubr.f32.gmra.mrb[0].mxu0 %v166
    %v297 = vpop.f32.mrb[0].mxu0
    %v298 = vadd.f32 %v101, %v297
    %v299 = vpop.f32.mrb[0].mxu0
    %300 = vmatprep.mubr.f32.mxu0 0.0
    %301 = vmatmul.mubr.f32.gmra.mrb[0].mxu0 %v169
    %v302 = vpop.f32.mrb[0].mxu0
    %v303 = vadd.f32 %v106, %v302
    %v304 = vpop.f32.mrb[0].mxu0
    %305 = vmatprep.mubr.f32.mxu0 0.0
    %306 = vmatmul.mubr.f32.gmra.mrb[0].mxu0 %v172
    %v307 = vpop.f32.mrb[0].mxu0
    %v308 = vadd.f32 %v111, %v307
    %v309 = vpop.f32.mrb[0].mxu0
    %310 = vmatprep.mubr.f32.mxu0 0.0
    %311 = vmatmul.mubr.f32.gmra.mrb[0].mxu0 %v175
    %v312 = vpop.f32.mrb[0].mxu0
    %v313 = vadd.f32 %v116, %v312
    %v314 = vpop.f32.mrb[0].mxu0
    %315 = vmatprep.mubr.f32.mxu0 0.0
    %316 = vmatmul.mubr.f32.gmra.mrb[0].mxu0 %v178
    %v317 = vpop.f32.mrb[0].mxu0
    %v318 = vadd.f32 %v121, %v317
    %v319 = vpop.f32.mrb[0].mxu0
    %320 = vmatprep.mubr.f32.mxu0 0.0
    %321 = vmatmul.mubr.f32.gmra.mrb[0].mxu0 %v181
    %v322 = vpop.f32.mrb[0].mxu0
    %v323 = vadd.f32 %v126, %v322
    %v324 = vpop.f32.mrb[0].mxu0
    %325 = vmatprep.mubr.f32.mxu0 0.0
    %326 = vmatmul.mubr.f32.gmra.mrb[0].mxu0 %v184
    %v327 = vpop.f32.mrb[0].mxu0
    %v328 = vadd.f32 %v131, %v327
    %v329 = vpop.f32.mrb[0].mxu0
    %330 = vmatprep.mubr.f32.mxu0 0.0
    %331 = vmatmul.mubr.f32.gmra.mrb[0].mxu0 %v187
    %v332 = vpop.f32.mrb[0].mxu0
    %v333 = vadd.f32 %v136, %v332
    %v334 = vpop.f32.mrb[0].mxu0
    %335 = vmatprep.mubr.f32.mxu0 0.0
    %336 = vmatmul.mubr.f32.gmra.mrb[0].mxu0 %v190
    %v337 = vpop.f32.mrb[0].mxu0
    %v338 = vadd.f32 %v141, %v337
    %v339 = vpop.f32.mrb[0].mxu0
    %340 = vdwg.mxu0
    %v341 = vmax.f32 %v263, 0.0
    %v342 = vmax.f32 %v268, 0.0
    %v343 = vmax.f32 %v273, 0.0
    %v344 = vmax.f32 %v278, 0.0
    %v345 = vmax.f32 %v283, 0.0
    %v346 = vmax.f32 %v288, 0.0
    %v347 = vmax.f32 %v293, 0.0
    %v348 = vmax.f32 %v298, 0.0
    %v349 = vmax.f32 %v303, 0.0
    %v350 = vmax.f32 %v308, 0.0
    %v351 = vmax.f32 %v313, 0.0
    %v352 = vmax.f32 %v318, 0.0
    %v353 = vmax.f32 %v323, 0.0
    %v354 = vmax.f32 %v328, 0.0
    %v355 = vmax.f32 %v333, 0.0
    %v356 = vmax.f32 %v338, 0.0
    %v357 = vld [vmem:[%s3] sm:$0xff]
    %v358 = vld [vmem:[%s3 + $0x8] sm:$0xff]
    %v359 = vld [vmem:[%s3 + $0x10] sm:$0xff]
    %v360 = vld [vmem:[%s3 + $0x18] sm:$0xff]
    %v361 = vld [vmem:[%s3 + $0x20] sm:$0xff]
    %v362 = vld [vmem:[%s3 + $0x28] sm:$0xff]
    %v363 = vld [vmem:[%s3 + $0x30] sm:$0xff]
    %v364 = vld [vmem:[%s3 + $0x38] sm:$0xff]
    %v365 = vld [vmem:[%s4] sm:$0xff]
    %v366 = vld [vmem:[%s4 + $0x8] sm:$0xff]
    %v367 = vld [vmem:[%s4 + $0x10] sm:$0xff]
    %v368 = vld [vmem:[%s4 + $0x18] sm:$0xff]
    %v369 = vld [vmem:[%s4 + $0x20] sm:$0xff]
    %v370 = vld [vmem:[%s4 + $0x28] sm:$0xff]
    %v371 = vld [vmem:[%s4 + $0x30] sm:$0xff]
    %v372 = vld [vmem:[%s4 + $0x38] sm:$0xff]
    %374 = vset.pattern.permute.xlu0 0
    %375 = vperm.xlu0 %374, %v365
    %v376 = vpop.permute.xlu0 %375
    %379 = vset.pattern.permute.xlu0 0
    %380 = vperm.xlu0 %379, %v366
    %v381 = vpop.permute.xlu0 %380
    %384 = vset.pattern.permute.xlu0 0
    %385 = vperm.xlu0 %384, %v367
    %v386 = vpop.permute.xlu0 %385
    %389 = vset.pattern.permute.xlu0 0
    %390 = vperm.xlu0 %389, %v368
    %v391 = vpop.permute.xlu0 %390
    %394 = vset.pattern.permute.xlu0 0
    %395 = vperm.xlu0 %394, %v369
    %v396 = vpop.permute.xlu0 %395
    %399 = vset.pattern.permute.xlu0 0
    %400 = vperm.xlu0 %399, %v370
    %v401 = vpop.permute.xlu0 %400
    %404 = vset.pattern.permute.xlu0 0
    %405 = vperm.xlu0 %404, %v371
    %v406 = vpop.permute.xlu0 %405
    %409 = vset.pattern.permute.xlu0 0
    %410 = vperm.xlu0 %409, %v372
    %v411 = vpop.permute.xlu0 %410
    %413 = vmatprep.subr.mxu0 0.0
    %414 = vmatpush1.msra.mxu0 %v341
    %415 = vmatprep.subr.mxu0 0.0
    %416 = vmatpush1.msra.mxu0 %v342
    %417 = vmatprep.subr.mxu0 0.0
    %418 = vmatpush1.msra.mxu0 %v343
    %419 = vmatprep.subr.mxu0 0.0
    %420 = vmatpush1.msra.mxu0 %v344
    %421 = vmatprep.subr.mxu0 0.0
    %422 = vmatpush1.msra.mxu0 %v345
    %423 = vmatprep.subr.mxu0 0.0
    %424 = vmatpush1.msra.mxu0 %v346
    %425 = vmatprep.subr.mxu0 0.0
    %426 = vmatpush1.msra.mxu0 %v347
    %427 = vmatprep.subr.mxu0 0.0
    %428 = vmatpush1.msra.mxu0 %v348
    %429 = vmatprep.subr.mxu0 0.0
    %430 = vmatpush1.msra.mxu0 %v349
    %431 = vmatprep.subr.mxu0 0.0
    %432 = vmatpush1.msra.mxu0 %v350
    %433 = vmatprep.subr.mxu0 0.0
    %434 = vmatpush1.msra.mxu0 %v351
    %435 = vmatprep.subr.mxu0 0.0
    %436 = vmatpush1.msra.mxu0 %v352
    %437 = vmatprep.subr.mxu0 0.0
    %438 = vmatpush1.msra.mxu0 %v353
    %439 = vmatprep.subr.mxu0 0.0
    %440 = vmatpush1.msra.mxu0 %v354
    %441 = vmatprep.subr.mxu0 0.0
    %442 = vmatpush1.msra.mxu0 %v355
    %443 = vmatprep.subr.mxu0 0.0
    %444 = vmatpush1.msra.mxu0 %v356
    %445 = vmatprep.subr.mxu0 0.0
    %446 = vmatpush1.msra.mxu0 0.0
    %447 = vmatprep.subr.mxu0 0.0
    %448 = vmatpush1.msra.mxu0 0.0
    %449 = vmatprep.subr.mxu0 0.0
    %450 = vmatpush1.msra.mxu0 0.0
    %451 = vmatprep.subr.mxu0 0.0
    %452 = vmatpush1.msra.mxu0 0.0
    %453 = vmatprep.subr.mxu0 0.0
    %454 = vmatpush1.msra.mxu0 0.0
    %455 = vmatprep.subr.mxu0 0.0
    %456 = vmatpush1.msra.mxu0 0.0
    %457 = vmatprep.subr.mxu0 0.0
    %458 = vmatpush1.msra.mxu0 0.0
    %459 = vmatprep.subr.mxu0 0.0
    %460 = vmatpush1.msra.mxu0 0.0
    %461 = vmatprep.subr.mxu0 0.0
    %462 = vmatpush1.msra.mxu0 0.0
    %463 = vmatprep.subr.mxu0 0.0
    %464 = vmatpush1.msra.mxu0 0.0
    %465 = vmatprep.subr.mxu0 0.0
    %466 = vmatpush1.msra.mxu0 0.0
    %467 = vmatprep.subr.mxu0 0.0
    %468 = vmatpush1.msra.mxu0 0.0
    %469 = vmatprep.subr.mxu0 0.0
    %470 = vmatpush1.msra.mxu0 0.0
    %471 = vmatprep.subr.mxu0 0.0
    %472 = vmatpush1.msra.mxu0 0.0
    %473 = vmatprep.subr.mxu0 0.0
    %474 = vmatpush1.msra.mxu0 0.0
    %475 = vmatprep.subr.mxu0 0.0
    %476 = vmatpush1.msra.mxu0 0.0
    %477 = vmatprep.mubr.f32.mxu0 0.0
    %478 = vmatmul.mubr.f32.gmra.mrb[0].mxu0 %v357
    %v479 = vpop.f32.mrb[0].mxu0
    %v480 = vadd.f32 %v376, %v479
    %v481 = vpop.f32.mrb[0].mxu0
    %482 = vmatprep.mubr.f32.mxu0 0.0
    %483 = vmatmul.mubr.f32.gmra.mrb[0].mxu0 %v358
    %v484 = vpop.f32.mrb[0].mxu0
    %v485 = vadd.f32 %v381, %v484
    %v486 = vpop.f32.mrb[0].mxu0
    %487 = vmatprep.mubr.f32.mxu0 0.0
    %488 = vmatmul.mubr.f32.gmra.mrb[0].mxu0 %v359
    %v489 = vpop.f32.mrb[0].mxu0
    %v490 = vadd.f32 %v386, %v489
    %v491 = vpop.f32.mrb[0].mxu0
    %492 = vmatprep.mubr.f32.mxu0 0.0
    %493 = vmatmul.mubr.f32.gmra.mrb[0].mxu0 %v360
    %v494 = vpop.f32.mrb[0].mxu0
    %v495 = vadd.f32 %v391, %v494
    %v496 = vpop.f32.mrb[0].mxu0
    %497 = vmatprep.mubr.f32.mxu0 0.0
    %498 = vmatmul.mubr.f32.gmra.mrb[0].mxu0 %v361
    %v499 = vpop.f32.mrb[0].mxu0
    %v500 = vadd.f32 %v396, %v499
    %v501 = vpop.f32.mrb[0].mxu0
    %502 = vmatprep.mubr.f32.mxu0 0.0
    %503 = vmatmul.mubr.f32.gmra.mrb[0].mxu0 %v362
    %v504 = vpop.f32.mrb[0].mxu0
    %v505 = vadd.f32 %v401, %v504
    %v506 = vpop.f32.mrb[0].mxu0
    %507 = vmatprep.mubr.f32.mxu0 0.0
    %508 = vmatmul.mubr.f32.gmra.mrb[0].mxu0 %v363
    %v509 = vpop.f32.mrb[0].mxu0
    %v510 = vadd.f32 %v406, %v509
    %v511 = vpop.f32.mrb[0].mxu0
    %512 = vmatprep.mubr.f32.mxu0 0.0
    %513 = vmatmul.mubr.f32.gmra.mrb[0].mxu0 %v364
    %v514 = vpop.f32.mrb[0].mxu0
    %v515 = vadd.f32 %v411, %v514
    %v516 = vpop.f32.mrb[0].mxu0
    %517 = vdwg.mxu0
    %v518 = vmax.f32 %v480, 0.0
    %v519 = vmax.f32 %v485, 0.0
    %v520 = vmax.f32 %v490, 0.0
    %v521 = vmax.f32 %v495, 0.0
    %v522 = vmax.f32 %v500, 0.0
    %v523 = vmax.f32 %v505, 0.0
    %v524 = vmax.f32 %v510, 0.0
    %v525 = vmax.f32 %v515, 0.0
    %v526 = vld [vmem:[%s5] sm:$0xff]
    %v527 = vld [vmem:[%s5 + $0x8] sm:$0xff]
    %v528 = vld [vmem:[%s5 + $0x10] sm:$0xff]
    %v529 = vld [vmem:[%s5 + $0x18] sm:$0xff]
    %v530 = vld [vmem:[%s5 + $0x20] sm:$0xff]
    %v531 = vld [vmem:[%s5 + $0x28] sm:$0xff]
    %v532 = vld [vmem:[%s5 + $0x30] sm:$0xff]
    %v533 = vld [vmem:[%s5 + $0x38] sm:$0xff]
    %535 = vset.pattern.permute.xlu0 0
    %536 = vperm.xlu0 %535, %v526
    %v537 = vpop.permute.xlu0 %536
    %540 = vset.pattern.permute.xlu0 0
    %541 = vperm.xlu0 %540, %v527
    %v542 = vpop.permute.xlu0 %541
    %545 = vset.pattern.permute.xlu0 0
    %546 = vperm.xlu0 %545, %v528
    %v547 = vpop.permute.xlu0 %546
    %550 = vset.pattern.permute.xlu0 0
    %551 = vperm.xlu0 %550, %v529
    %v552 = vpop.permute.xlu0 %551
    %555 = vset.pattern.permute.xlu0 0
    %556 = vperm.xlu0 %555, %v530
    %v557 = vpop.permute.xlu0 %556
    %560 = vset.pattern.permute.xlu0 0
    %561 = vperm.xlu0 %560, %v531
    %v562 = vpop.permute.xlu0 %561
    %565 = vset.pattern.permute.xlu0 0
    %566 = vperm.xlu0 %565, %v532
    %v567 = vpop.permute.xlu0 %566
    %570 = vset.pattern.permute.xlu0 0
    %571 = vperm.xlu0 %570, %v533
    %v572 = vpop.permute.xlu0 %571
    %v574 = vmul.f32 %v518, %v537
    %v575 = vmul.f32 %v519, %v542
    %v576 = vmul.f32 %v520, %v547
    %v577 = vmul.f32 %v521, %v552
    %v578 = vmul.f32 %v522, %v557
    %v579 = vmul.f32 %v523, %v562
    %v580 = vmul.f32 %v524, %v567
    %v581 = vmul.f32 %v525, %v572
    %vm582 = vcmask 64512
    %v583 = vsel %vm582, %v574, 0.0
    %v584 = vsel %vm582, %v575, 0.0
    %v585 = vadd.f32 %v583, %v584
    %v586 = vsel %vm582, %v576, 0.0
    %v587 = vadd.f32 %v585, %v586
    %v588 = vsel %vm582, %v577, 0.0
    %v589 = vadd.f32 %v587, %v588
    %v590 = vsel %vm582, %v578, 0.0
    %v591 = vadd.f32 %v589, %v590
    %v592 = vsel %vm582, %v579, 0.0
    %v593 = vadd.f32 %v591, %v592
    %v594 = vsel %vm582, %v580, 0.0
    %v595 = vadd.f32 %v593, %v594
    %v596 = vsel %vm582, %v581, 0.0
    %v597 = vadd.f32 %v595, %v596
    %v598 = vrot.slane %v597, 4
    %v599 = vadd.f32 %v597, %v598
    %v600 = vrot.slane %v599, 2
    %v601 = vadd.f32 %v599, %v600
    %v602 = vrot.slane %v601, 1
    %v603 = vadd.f32 %v601, %v602
    %s604 = sld [smem:[#allocation2]]
    %v605 = vstv %s604
    %v606 = vadd.f32 %v603, %v605
    %vm607 = vcmask 57344
    %608 = vst.msk [vmem:[#allocation3] sm:$0x1] %vm607, %v606
    // Predicated region
    $region30: #{tpu_custom_call.1} parent=1 // pred_check
      _
    $region31: #{tpu_custom_call.1} parent=1 // pred_check_branch
      %610 = sbr.rel (0) target = $region33
    $region32: #{tpu_custom_call.1} parent=1 // pred_region
      %s612 = ssub.s32 16, 16
      %613 = vsyncadd [#allocation4], %s612
      %s615 = sshll.u32 [#allocation3], 4
      %s616 = int_to_ptr.vmem [resolvable:$true] %s615
      %618 = dma.vmem_to_hbm [thread:$0]  %s616, 16, %s7, [#allocation4]
    $region33: #{tpu_custom_call.1} parent=1 // pred_fallthru
      _
    // Predicated region
    $region34: #{tpu_custom_call.1} parent=1 // pred_check
      _
    $region35: #{tpu_custom_call.1} parent=1 // pred_check_branch
      %620 = sbr.rel (0) target = $region37
    $region36: #{tpu_custom_call.1} parent=1 // pred_region
      %621 = dma.done [#allocation4], 16
    $region37: #{tpu_custom_call.1} parent=1 // pred_fallthru
      _
    %622 = vsyncpa [#allocation4], 1

</llo_original>
